<compile_context>
chip_gen: v7x
topology: tpu7x:2x2x1
jax: 0.10.0
libtpu: 0.0.40
codegen_flags: <defaults>
</compile_context>

<pallas_src>
import jax
import jax.numpy as jnp
from jax.experimental import pallas as pl
from jax.experimental.pallas import tpu as pltpu


def _leaky_relu(x, slope=0.01):
    # mul + max (lighter on the 4-wide VPU than compare + select).
    return jnp.maximum(x, slope * x)


def _round_up(n, m):
    return (n + m - 1) // m * m


def dqn_kernel(x_ref,
               w1_ref, b1_ref,
               w2_ref, b2_ref,
               w3_ref, b3_ref,
               w4_ref, b4_ref,
               o_ref):
    # Fully fused 4-layer MLP on one batch tile.
    # Matmul inputs are (b)f16/f32 as provided; accumulation + elementwise
    # math stay in f32 via preferred_element_type.
    h = jnp.dot(x_ref[...], w1_ref[...], preferred_element_type=jnp.float32)
    h = _leaky_relu(h + b1_ref[...])

    h = jnp.dot(h.astype(w2_ref.dtype), w2_ref[...],
                preferred_element_type=jnp.float32)
    h = _leaky_relu(h + b2_ref[...])

    h = jnp.dot(h.astype(w3_ref.dtype), w3_ref[...],
                preferred_element_type=jnp.float32)
    h = _leaky_relu(h + b3_ref[...])

    h = jnp.dot(h.astype(w4_ref.dtype), w4_ref[...],
                preferred_element_type=jnp.float32)
    o_ref[...] = (h + b4_ref[...]).astype(o_ref.dtype)


def dqn_forward(x, params, *, tile_b=512, use_bf16=True):
    """x: (B, state_size) float32.  params: dict with w1..w4 (in,out), b1..b4 (1,out)."""
    B, state_size = x.shape
    action_size = params["w4"].shape[1]

    # TODO(synk): for tiny batches (B < a few hundred) plain XLA fusion beats a
    # pallas_call; a production path would dispatch on B. Kernel path used here.

    # Batch tile: large enough to amortize per-step overhead, multiple of 8
    # sublanes, clamped so the demo-sized batch doesn't over-pad.  Double-
    # buffered x/out tiles + ~14 KB of resident params stay far below the
    # v7x 32 MiB scoped-VMEM default.
    tile_b = max(8, min(tile_b, _round_up(B, 8)))
    padded_B = _round_up(B, tile_b)
    if padded_B != B:
        x = jnp.pad(x, ((0, padded_B - B), (0, 0)))

    in_dtype = jnp.bfloat16 if use_bf16 else jnp.float32
    x_in = x.astype(in_dtype)
    w = [params[f"w{i}"].astype(in_dtype) for i in range(1, 5)]
    b = [params[f"b{i}"].astype(jnp.float32) for i in range(1, 5)]

    # x / out are tiled over the batch; weights & biases are VMEM-resident
    # (constant block index -> fetched once, reused across all grid steps).
    def resident(arr):
        return pl.BlockSpec(arr.shape, lambda i: (0, 0))

    in_specs = [pl.BlockSpec((tile_b, state_size), lambda i: (i, 0))]
    operands = [x_in]
    for wi, bi in zip(w, b):
        in_specs += [resident(wi), resident(bi)]
        operands += [wi, bi]

    out_spec = pl.BlockSpec((tile_b, action_size), lambda i: (i, 0))

    out = pl.pallas_call(
        dqn_kernel,
        out_shape=jax.ShapeDtypeStruct((padded_B, action_size), jnp.float32),
        grid=(padded_B // tile_b,),
        in_specs=in_specs,
        out_specs=out_spec,
        compiler_params=pltpu.CompilerParams(
            dimension_semantics=("parallel",),      # v7x: shard batch tiles across both TCs
            vmem_limit_bytes=32 * 1024 * 1024,       # stay within v7x scoped-VMEM default
        ),
    )(*operands)

    return out[:B] if padded_B != B else out


def init_dqn_params(key, state_size, action_size):
    """Deterministic init mimicking nn.Linear default U(-1/sqrt(fan_in), +)."""
    sizes = [(state_size, 64), (64, 32), (32, 8), (8, action_size)]
    params = {}
    for i, (fan_in, fan_out) in enumerate(sizes, start=1):
        key, kw, kb = jax.random.split(key, 3)
        bound = 1.0 / jnp.sqrt(float(fan_in))
        # stored as (in, out) so the kernel computes h @ W (PyTorch stores (out, in))
        params[f"w{i}"] = jax.random.uniform(
            kw, (fan_in, fan_out), jnp.float32, minval=-bound, maxval=bound)
        params[f"b{i}"] = jax.random.uniform(
            kb, (1, fan_out), jnp.float32, minval=-bound, maxval=bound)
    return params


def dqn_reference(x, params, *, use_bf16=True):
    """Plain-JAX reference mirroring the kernel's mixed-precision recipe."""
    in_dtype = jnp.bfloat16 if use_bf16 else jnp.float32
    h = x.astype(in_dtype)
    for i in range(1, 5):
        w = params[f"w{i}"].astype(in_dtype)
        h = jnp.dot(h, w, preferred_element_type=jnp.float32) + params[f"b{i}"]
        if i < 4:
            h = jnp.maximum(h, 0.01 * h)
        else:
            break
        h = h.astype(in_dtype)
    return h


if __name__ == "__main__":
    state_size = 16
    action_size = 4
    batch = 8

    key = jax.random.PRNGKey(0)
    key, kx = jax.random.split(key)
    x = jax.random.normal(kx, (batch, state_size), dtype=jnp.float32)
    params = init_dqn_params(key, state_size, action_size)

    out = dqn_forward(x, params)
    out = jax.block_until_ready(out)

    ref = dqn_reference(x, params)
    assert out.shape == (batch, action_size)
    assert jnp.allclose(out, ref, atol=1e-3, rtol=1e-3), (
        float(jnp.max(jnp.abs(out - ref))))

    # Also exercise a non-tile-multiple larger batch (padding + grid path).
    key, kx2 = jax.random.split(key)
    x_big = jax.random.normal(kx2, (1037, state_size), dtype=jnp.float32)
    out_big = jax.block_until_ready(dqn_forward(x_big, params))
    ref_big = dqn_reference(x_big, params)
    assert out_big.shape == (1037, action_size)
    assert jnp.allclose(out_big, ref_big, atol=1e-3, rtol=1e-3)

    print("KERNEL_OK")
</pallas_src>

<mosaic_0001>
module attributes {stable_mosaic.version = 11 : i64} {
  func.func @dqn_kernel(%arg0: i32, %arg1: memref<8x16xbf16, #tpu.memory_space<vmem>>, %arg2: memref<16x64xbf16, #tpu.memory_space<vmem>>, %arg3: memref<1x64xf32, #tpu.memory_space<vmem>>, %arg4: memref<64x32xbf16, #tpu.memory_space<vmem>>, %arg5: memref<1x32xf32, #tpu.memory_space<vmem>>, %arg6: memref<32x8xbf16, #tpu.memory_space<vmem>>, %arg7: memref<1x8xf32, #tpu.memory_space<vmem>>, %arg8: memref<8x4xbf16, #tpu.memory_space<vmem>>, %arg9: memref<1x4xf32, #tpu.memory_space<vmem>>, %arg10: memref<8x4xf32, #tpu.memory_space<vmem>>) attributes {dimension_semantics = [#tpu.dimension_semantics<parallel>], iteration_bounds = array<i64: 1>, scalar_prefetch = 0 : i64, scratch_operands = 0 : i64, tpu.core_type = #tpu.core_type<tc>, window_params = [{transform_indices = @transform_0, window_bounds = array<i64: 8, 16>}, {pipeline_mode = #tpu.pipeline_mode<synchronous>, transform_indices = @transform_1, window_bounds = array<i64: 16, 64>}, {pipeline_mode = #tpu.pipeline_mode<synchronous>, transform_indices = @transform_2, window_bounds = array<i64: 1, 64>}, {pipeline_mode = #tpu.pipeline_mode<synchronous>, transform_indices = @transform_3, window_bounds = array<i64: 64, 32>}, {pipeline_mode = #tpu.pipeline_mode<synchronous>, transform_indices = @transform_4, window_bounds = array<i64: 1, 32>}, {pipeline_mode = #tpu.pipeline_mode<synchronous>, transform_indices = @transform_5, window_bounds = array<i64: 32, 8>}, {pipeline_mode = #tpu.pipeline_mode<synchronous>, transform_indices = @transform_6, window_bounds = array<i64: 1, 8>}, {pipeline_mode = #tpu.pipeline_mode<synchronous>, transform_indices = @transform_7, window_bounds = array<i64: 8, 4>}, {pipeline_mode = #tpu.pipeline_mode<synchronous>, transform_indices = @transform_8, window_bounds = array<i64: 1, 4>}, {transform_indices = @transform_9, window_bounds = array<i64: 8, 4>}]} {
    %c0 = arith.constant 0 : index
    %c0_0 = arith.constant 0 : index
    %0 = vector.load %arg1[%c0, %c0_0] : memref<8x16xbf16, #tpu.memory_space<vmem>>, vector<8x16xbf16>
    %c0_1 = arith.constant 0 : index
    %c0_2 = arith.constant 0 : index
    %1 = vector.load %arg2[%c0_1, %c0_2] : memref<16x64xbf16, #tpu.memory_space<vmem>>, vector<16x64xbf16>
    %cst = arith.constant dense<0.000000e+00> : vector<8x64xf32>
    %2 = tpu.matmul %0, %1, %cst {dimension_numbers = #tpu.dot_dimension_numbers<[1], [0], [0], [1], [0, 0, 1, 1], [], []>} : vector<8x16xbf16>, vector<16x64xbf16>, vector<8x64xf32> -> vector<8x64xf32>
    %c0_3 = arith.constant 0 : index
    %c0_4 = arith.constant 0 : index
    %3 = vector.load %arg3[%c0_3, %c0_4] : memref<1x64xf32, #tpu.memory_space<vmem>>, vector<1x64xf32>
    %4 = vector.broadcast %3 : vector<1x64xf32> to vector<8x64xf32>
    %5 = arith.addf %2, %4 : vector<8x64xf32>
    %cst_5 = arith.constant 0.00999999977 : f32
    %6 = vector.broadcast %cst_5 : f32 to vector<8x64xf32>
    %7 = arith.mulf %6, %5 : vector<8x64xf32>
    %8 = arith.maximumf %5, %7 : vector<8x64xf32>
    %9 = arith.truncf %8 : vector<8x64xf32> to vector<8x64xbf16>
    %c0_6 = arith.constant 0 : index
    %c0_7 = arith.constant 0 : index
    %10 = vector.load %arg4[%c0_6, %c0_7] : memref<64x32xbf16, #tpu.memory_space<vmem>>, vector<64x32xbf16>
    %cst_8 = arith.constant dense<0.000000e+00> : vector<8x32xf32>
    %11 = tpu.matmul %9, %10, %cst_8 {dimension_numbers = #tpu.dot_dimension_numbers<[1], [0], [0], [1], [0, 0, 1, 1], [], []>} : vector<8x64xbf16>, vector<64x32xbf16>, vector<8x32xf32> -> vector<8x32xf32>
    %c0_9 = arith.constant 0 : index
    %c0_10 = arith.constant 0 : index
    %12 = vector.load %arg5[%c0_9, %c0_10] : memref<1x32xf32, #tpu.memory_space<vmem>>, vector<1x32xf32>
    %13 = vector.broadcast %12 : vector<1x32xf32> to vector<8x32xf32>
    %14 = arith.addf %11, %13 : vector<8x32xf32>
    %cst_11 = arith.constant 0.00999999977 : f32
    %15 = vector.broadcast %cst_11 : f32 to vector<8x32xf32>
    %16 = arith.mulf %15, %14 : vector<8x32xf32>
    %17 = arith.maximumf %14, %16 : vector<8x32xf32>
    %18 = arith.truncf %17 : vector<8x32xf32> to vector<8x32xbf16>
    %c0_12 = arith.constant 0 : index
    %c0_13 = arith.constant 0 : index
    %19 = vector.load %arg6[%c0_12, %c0_13] : memref<32x8xbf16, #tpu.memory_space<vmem>>, vector<32x8xbf16>
    %cst_14 = arith.constant dense<0.000000e+00> : vector<8x8xf32>
    %20 = tpu.matmul %18, %19, %cst_14 {dimension_numbers = #tpu.dot_dimension_numbers<[1], [0], [0], [1], [0, 0, 1, 1], [], []>} : vector<8x32xbf16>, vector<32x8xbf16>, vector<8x8xf32> -> vector<8x8xf32>
    %c0_15 = arith.constant 0 : index
    %c0_16 = arith.constant 0 : index
    %21 = vector.load %arg7[%c0_15, %c0_16] : memref<1x8xf32, #tpu.memory_space<vmem>>, vector<1x8xf32>
    %22 = vector.broadcast %21 : vector<1x8xf32> to vector<8x8xf32>
    %23 = arith.addf %20, %22 : vector<8x8xf32>
    %cst_17 = arith.constant 0.00999999977 : f32
    %24 = vector.broadcast %cst_17 : f32 to vector<8x8xf32>
    %25 = arith.mulf %24, %23 : vector<8x8xf32>
    %26 = arith.maximumf %23, %25 : vector<8x8xf32>
    %27 = arith.truncf %26 : vector<8x8xf32> to vector<8x8xbf16>
    %c0_18 = arith.constant 0 : index
    %c0_19 = arith.constant 0 : index
    %28 = vector.load %arg8[%c0_18, %c0_19] : memref<8x4xbf16, #tpu.memory_space<vmem>>, vector<8x4xbf16>
    %cst_20 = arith.constant dense<0.000000e+00> : vector<8x4xf32>
    %29 = tpu.matmul %27, %28, %cst_20 {dimension_numbers = #tpu.dot_dimension_numbers<[1], [0], [0], [1], [0, 0, 1, 1], [], []>} : vector<8x8xbf16>, vector<8x4xbf16>, vector<8x4xf32> -> vector<8x4xf32>
    %c0_21 = arith.constant 0 : index
    %c0_22 = arith.constant 0 : index
    %30 = vector.load %arg9[%c0_21, %c0_22] : memref<1x4xf32, #tpu.memory_space<vmem>>, vector<1x4xf32>
    %31 = vector.broadcast %30 : vector<1x4xf32> to vector<8x4xf32>
    %32 = arith.addf %29, %31 : vector<8x4xf32>
    %c0_23 = arith.constant 0 : index
    %c0_24 = arith.constant 0 : index
    %33 = vector.load %arg10[%c0_23, %c0_24] : memref<8x4xf32, #tpu.memory_space<vmem>>, vector<8x4xf32>
    tpu.vector_store %arg10[%c0_23, %c0_24], %32 {strides = array<i32>} : memref<8x4xf32, #tpu.memory_space<vmem>>, vector<8x4xf32>,
    return
  }
  func.func @transform_0(%arg0: i32) -> (i32, i32) {
    %c0_i32 = arith.constant 0 : i32
    %c0_i32_0 = arith.constant 0 : i32
    return %arg0, %c0_i32 : i32, i32
  }
  func.func @transform_1(%arg0: i32) -> (i32, i32) {
    %c0_i32 = arith.constant 0 : i32
    %c0_i32_0 = arith.constant 0 : i32
    %c0_i32_1 = arith.constant 0 : i32
    return %c0_i32, %c0_i32_0 : i32, i32
  }
  func.func @transform_2(%arg0: i32) -> (i32, i32) {
    %c0_i32 = arith.constant 0 : i32
    %c0_i32_0 = arith.constant 0 : i32
    %c0_i32_1 = arith.constant 0 : i32
    return %c0_i32, %c0_i32_0 : i32, i32
  }
  func.func @transform_3(%arg0: i32) -> (i32, i32) {
    %c0_i32 = arith.constant 0 : i32
    %c0_i32_0 = arith.constant 0 : i32
    %c0_i32_1 = arith.constant 0 : i32
    return %c0_i32, %c0_i32_0 : i32, i32
  }
  func.func @transform_4(%arg0: i32) -> (i32, i32) {
    %c0_i32 = arith.constant 0 : i32
    %c0_i32_0 = arith.constant 0 : i32
    %c0_i32_1 = arith.constant 0 : i32
    return %c0_i32, %c0_i32_0 : i32, i32
  }
  func.func @transform_5(%arg0: i32) -> (i32, i32) {
    %c0_i32 = arith.constant 0 : i32
    %c0_i32_0 = arith.constant 0 : i32
    %c0_i32_1 = arith.constant 0 : i32
    return %c0_i32, %c0_i32_0 : i32, i32
  }
  func.func @transform_6(%arg0: i32) -> (i32, i32) {
    %c0_i32 = arith.constant 0 : i32
    %c0_i32_0 = arith.constant 0 : i32
    %c0_i32_1 = arith.constant 0 : i32
    return %c0_i32, %c0_i32_0 : i32, i32
  }
  func.func @transform_7(%arg0: i32) -> (i32, i32) {
    %c0_i32 = arith.constant 0 : i32
    %c0_i32_0 = arith.constant 0 : i32
    %c0_i32_1 = arith.constant 0 : i32
    return %c0_i32, %c0_i32_0 : i32, i32
  }
  func.func @transform_8(%arg0: i32) -> (i32, i32) {
    %c0_i32 = arith.constant 0 : i32
    %c0_i32_0 = arith.constant 0 : i32
    %c0_i32_1 = arith.constant 0 : i32
    return %c0_i32, %c0_i32_0 : i32, i32
  }
  func.func @transform_9(%arg0: i32) -> (i32, i32) {
    %c0_i32 = arith.constant 0 : i32
    %c0_i32_0 = arith.constant 0 : i32
    return %arg0, %c0_i32 : i32, i32
  }
}

</mosaic_0001>

<llo_original>
// kernel: tpu_custom_call.1
$region0: #{tpu_custom_call.1}
  #allocation0 [shape = 'u32[]', space=smem, size = 0x4, offset = 0x4, fixed_abs, tag = 'smem constant byte address 0x4 - core index']
  #allocation1 [shape = 'u32[144,128]{1,0:T(1,128)}', space=vmem, size = 0x12000, scoped, tag = 'internal scratch']
  %s0 = inlined_call_operand.vmem [shape: bf16[8,16], index: 0, kind: input, shape index: {}]
  %s1 = inlined_call_operand.vmem [shape: bf16[16,64], index: 1, kind: input, shape index: {}]
  %s2 = inlined_call_operand.vmem [shape: f32[1,64], index: 2, kind: input, shape index: {}]
  %s3 = inlined_call_operand.vmem [shape: bf16[64,32], index: 3, kind: input, shape index: {}]
  %s4 = inlined_call_operand.vmem [shape: f32[1,32], index: 4, kind: input, shape index: {}]
  %s5 = inlined_call_operand.vmem [shape: bf16[32,8], index: 5, kind: input, shape index: {}]
  %s6 = inlined_call_operand.vmem [shape: f32[1,8], index: 6, kind: input, shape index: {}]
  %s7 = inlined_call_operand.vmem [shape: bf16[8,4], index: 7, kind: input, shape index: {}]
  %s8 = inlined_call_operand.vmem [shape: f32[1,4], index: 8, kind: input, shape index: {}]
  %s9 = inlined_call_operand.vmem [shape: f32[8,4], index: 9, kind: output, shape index: {}]
  %s10 = sld [smem:[#allocation0]]
  $region46: #{tpu_custom_call.1} parent=0
    _
  %s12 = ssub.s32 1, %s10
  %s13 = scalar_select 0, %s12, %s10
  // Predicated region
  $region2: #{tpu_custom_call.1} parent=0 // pred_check
    _
  $region3: #{tpu_custom_call.1} parent=0 // pred_check_branch
    %15 = sbr.rel (0) target = $region5
  $region4: #{tpu_custom_call.1} parent=0 // pred_region
    _
  $region5: #{tpu_custom_call.1} parent=0 // pred_fallthru
    _
  // Predicated region
  $region6: #{tpu_custom_call.1} parent=0 // pred_check
    _
  $region7: #{tpu_custom_call.1} parent=0 // pred_check_branch
    %17 = sbr.rel (0) target = $region9
  $region8: #{tpu_custom_call.1} parent=0 // pred_region
    _
  $region9: #{tpu_custom_call.1} parent=0 // pred_fallthru
    _
  // Predicated region
  $region10: #{tpu_custom_call.1} parent=0 // pred_check
    _
  $region11: #{tpu_custom_call.1} parent=0 // pred_check_branch
    %19 = sbr.rel (0) target = $region13
  $region12: #{tpu_custom_call.1} parent=0 // pred_region
    _
  $region13: #{tpu_custom_call.1} parent=0 // pred_fallthru
    _
  // Predicated region
  $region14: #{tpu_custom_call.1} parent=0 // pred_check
    _
  $region15: #{tpu_custom_call.1} parent=0 // pred_check_branch
    %21 = sbr.rel (0) target = $region17
  $region16: #{tpu_custom_call.1} parent=0 // pred_region
    _
  $region17: #{tpu_custom_call.1} parent=0 // pred_fallthru
    _
  // Predicated region
  $region18: #{tpu_custom_call.1} parent=0 // pred_check
    _
  $region19: #{tpu_custom_call.1} parent=0 // pred_check_branch
    %23 = sbr.rel (0) target = $region21
  $region20: #{tpu_custom_call.1} parent=0 // pred_region
    _
  $region21: #{tpu_custom_call.1} parent=0 // pred_fallthru
    _
  // Predicated region
  $region22: #{tpu_custom_call.1} parent=0 // pred_check
    _
  $region23: #{tpu_custom_call.1} parent=0 // pred_check_branch
    %25 = sbr.rel (0) target = $region25
  $region24: #{tpu_custom_call.1} parent=0 // pred_region
    _
  $region25: #{tpu_custom_call.1} parent=0 // pred_fallthru
    _
  // Predicated region
  $region26: #{tpu_custom_call.1} parent=0 // pred_check
    _
  $region27: #{tpu_custom_call.1} parent=0 // pred_check_branch
    %27 = sbr.rel (0) target = $region29
  $region28: #{tpu_custom_call.1} parent=0 // pred_region
    _
  $region29: #{tpu_custom_call.1} parent=0 // pred_fallthru
    _
  // Predicated region
  $region30: #{tpu_custom_call.1} parent=0 // pred_check
    _
  $region31: #{tpu_custom_call.1} parent=0 // pred_check_branch
    %29 = sbr.rel (0) target = $region33
  $region32: #{tpu_custom_call.1} parent=0 // pred_region
    _
  $region33: #{tpu_custom_call.1} parent=0 // pred_fallthru
    _
  // Predicated region
  $region34: #{tpu_custom_call.1} parent=0 // pred_check
    _
  $region35: #{tpu_custom_call.1} parent=0 // pred_check_branch
    %31 = sbr.rel (0) target = $region37
  $region36: #{tpu_custom_call.1} parent=0 // pred_region
    _
  $region37: #{tpu_custom_call.1} parent=0 // pred_fallthru
    _
  %v33 = vld [vmem:[%s0] sm:$0xf]
  %v34 = vld [vmem:[%s1] sm:$0xf]
  %v35 = vld [vmem:[%s1 + $0x4] sm:$0xf]
  %v36 = vld [vmem:[%s2] sm:$0x1]
  %v38 = vlaneseq
  %v39 = vshrl.u32 %v38, 7
  %v40 = vsub.s32 0, %v39
  %v41 = vrot.slane %v36, %v40
  %v45 = vunpack.c.l.b16 %v34
  %v46 = vunpack.c.l.b16 %v35
  %v47 = vpack.c.b16 %v46, %v45
  %vm49 = vcmask 130048
  %v51 = vsel %vm49, %v33, 0
  %53 = vmatprep.subr.bf16.mxu0 0
  %54 = vmatpush1.bf16.msra.mxu0 %v47
  %55 = vmatprep.subr.bf16.mxu0 0
  %56 = vmatpush1.bf16.msra.mxu0 0
  %57 = vmatprep.subr.bf16.mxu0 0
  %58 = vmatpush1.bf16.msra.mxu0 0
  %59 = vmatprep.subr.bf16.mxu0 0
  %60 = vmatpush1.bf16.msra.mxu0 0
  %61 = vmatprep.subr.bf16.mxu0 0
  %62 = vmatpush1.bf16.msra.mxu0 0
  %63 = vmatprep.subr.bf16.mxu0 0
  %64 = vmatpush1.bf16.msra.mxu0 0
  %65 = vmatprep.subr.bf16.mxu0 0
  %66 = vmatpush1.bf16.msra.mxu0 0
  %67 = vmatprep.subr.bf16.mxu0 0
  %68 = vmatpush1.bf16.msra.mxu0 0
  %69 = vmatprep.subr.bf16.mxu0 0
  %70 = vmatpush1.bf16.msra.mxu0 0
  %71 = vmatprep.subr.bf16.mxu0 0
  %72 = vmatpush1.bf16.msra.mxu0 0
  %73 = vmatprep.subr.bf16.mxu0 0
  %74 = vmatpush1.bf16.msra.mxu0 0
  %75 = vmatprep.subr.bf16.mxu0 0
  %76 = vmatpush1.bf16.msra.mxu0 0
  %77 = vmatprep.subr.bf16.mxu0 0
  %78 = vmatpush1.bf16.msra.mxu0 0
  %79 = vmatprep.subr.bf16.mxu0 0
  %80 = vmatpush1.bf16.msra.mxu0 0
  %81 = vmatprep.subr.bf16.mxu0 0
  %82 = vmatpush1.bf16.msra.mxu0 0
  %83 = vmatprep.subr.bf16.mxu0 0
  %84 = vmatpush1.bf16.msra.mxu0 0
  %85 = vmatprep.mubr.bf16.mxu0 0
  %86 = vmatmul.mubr.bf16.gmra.mrb[0].mxu0 %v51
  %v87 = vpop.f32.mrb[0].mxu0
  %v88 = vadd.f32 %v41, %v87
  %v89 = vpop.f32.mrb[0].mxu0
  %v90 = vpop.f32.mrb[0].mxu0
  %v91 = vpop.f32.mrb[0].mxu0
  %92 = vdwg.mxu0
  %v93 = vmul.f32 %v88, 0.01
  %v94 = vmax.f32 %v88, %v93
  %v95 = vpack.c.bf16 %v94, %v94
  %v96 = vld [vmem:[%s3] sm:$0xf]
  %v97 = vld [vmem:[%s3 + $0x4] sm:$0xf]
  %v98 = vld [vmem:[%s3 + $0x8] sm:$0xf]
  %v99 = vld [vmem:[%s3 + $0xc] sm:$0xf]
  %v100 = vld [vmem:[%s3 + $0x10] sm:$0xf]
  %v101 = vld [vmem:[%s3 + $0x14] sm:$0xf]
  %v102 = vld [vmem:[%s3 + $0x18] sm:$0xf]
  %v103 = vld [vmem:[%s3 + $0x1c] sm:$0xf]
  %v104 = vld [vmem:[%s4] sm:$0x1]
  %v106 = vlaneseq
  %v107 = vshrl.u32 %v106, 7
  %v108 = vsub.s32 0, %v107
  %v109 = vrot.slane %v104, %v108
  %v119 = vunpack.c.l.b16 %v96
  %v120 = vunpack.c.l.b16 %v97
  %v121 = vunpack.c.l.b16 %v98
  %v122 = vunpack.c.l.b16 %v99
  %v123 = vunpack.c.l.b16 %v100
  %v124 = vunpack.c.l.b16 %v101
  %v125 = vunpack.c.l.b16 %v102
  %v126 = vunpack.c.l.b16 %v103
  %v127 = vpack.c.b16 %v120, %v119
  %v128 = vpack.c.b16 %v122, %v121
  %v129 = vpack.c.b16 %v124, %v123
  %v130 = vpack.c.b16 %v126, %v125
  %vm135 = vcmask 523264
  %v137 = vsel %vm135, %v95, 0
  %139 = vmatprep.subr.bf16.mxu0 0
  %140 = vmatpush1.bf16.msra.mxu0 %v127
  %141 = vmatprep.subr.bf16.mxu0 0
  %142 = vmatpush1.bf16.msra.mxu0 %v128
  %143 = vmatprep.subr.bf16.mxu0 0
  %144 = vmatpush1.bf16.msra.mxu0 %v129
  %145 = vmatprep.subr.bf16.mxu0 0
  %146 = vmatpush1.bf16.msra.mxu0 %v130
  %147 = vmatprep.subr.bf16.mxu0 0
  %148 = vmatpush1.bf16.msra.mxu0 0
  %149 = vmatprep.subr.bf16.mxu0 0
  %150 = vmatpush1.bf16.msra.mxu0 0
  %151 = vmatprep.subr.bf16.mxu0 0
  %152 = vmatpush1.bf16.msra.mxu0 0
  %153 = vmatprep.subr.bf16.mxu0 0
  %154 = vmatpush1.bf16.msra.mxu0 0
  %155 = vmatprep.subr.bf16.mxu0 0
  %156 = vmatpush1.bf16.msra.mxu0 0
  %157 = vmatprep.subr.bf16.mxu0 0
  %158 = vmatpush1.bf16.msra.mxu0 0
  %159 = vmatprep.subr.bf16.mxu0 0
  %160 = vmatpush1.bf16.msra.mxu0 0
  %161 = vmatprep.subr.bf16.mxu0 0
  %162 = vmatpush1.bf16.msra.mxu0 0
  %163 = vmatprep.subr.bf16.mxu0 0
  %164 = vmatpush1.bf16.msra.mxu0 0
  %165 = vmatprep.subr.bf16.mxu0 0
  %166 = vmatpush1.bf16.msra.mxu0 0
  %167 = vmatprep.subr.bf16.mxu0 0
  %168 = vmatpush1.bf16.msra.mxu0 0
  %169 = vmatprep.subr.bf16.mxu0 0
  %170 = vmatpush1.bf16.msra.mxu0 0
  %171 = vmatprep.mubr.bf16.mxu0 0
  %172 = vmatmul.mubr.bf16.gmra.mrb[0].mxu0 %v137
  %v173 = vpop.f32.mrb[0].mxu0
  %v174 = vadd.f32 %v109, %v173
  %v175 = vpop.f32.mrb[0].mxu0
  %v176 = vpop.f32.mrb[0].mxu0
  %v177 = vpop.f32.mrb[0].mxu0
  %178 = vdwg.mxu0
  %v179 = vmul.f32 %v174, 0.01
  %v180 = vmax.f32 %v174, %v179
  %v181 = vpack.c.bf16 %v180, %v180
  %v182 = vld [vmem:[%s5] sm:$0xf]
  %v183 = vld [vmem:[%s5 + $0x4] sm:$0xf]
  %v184 = vld [vmem:[%s5 + $0x8] sm:$0xf]
  %v185 = vld [vmem:[%s5 + $0xc] sm:$0xf]
  %v186 = vld [vmem:[%s6] sm:$0x1]
  %v188 = vlaneseq
  %v189 = vshrl.u32 %v188, 7
  %v190 = vsub.s32 0, %v189
  %v191 = vrot.slane %v186, %v190
  %v197 = vunpack.c.l.b16 %v182
  %v198 = vunpack.c.l.b16 %v183
  %v199 = vunpack.c.l.b16 %v184
  %v200 = vunpack.c.l.b16 %v185
  %v201 = vpack.c.b16 %v198, %v197
  %v202 = vpack.c.b16 %v200, %v199
  %vm205 = vcmask 261120
  %v207 = vsel %vm205, %v181, 0
  %209 = vmatprep.subr.bf16.mxu0 0
  %210 = vmatpush1.bf16.msra.mxu0 %v201
  %211 = vmatprep.subr.bf16.mxu0 0
  %212 = vmatpush1.bf16.msra.mxu0 %v202
  %213 = vmatprep.subr.bf16.mxu0 0
  %214 = vmatpush1.bf16.msra.mxu0 0
  %215 = vmatprep.subr.bf16.mxu0 0
  %216 = vmatpush1.bf16.msra.mxu0 0
  %217 = vmatprep.subr.bf16.mxu0 0
  %218 = vmatpush1.bf16.msra.mxu0 0
  %219 = vmatprep.subr.bf16.mxu0 0
  %220 = vmatpush1.bf16.msra.mxu0 0
  %221 = vmatprep.subr.bf16.mxu0 0
  %222 = vmatpush1.bf16.msra.mxu0 0
  %223 = vmatprep.subr.bf16.mxu0 0
  %224 = vmatpush1.bf16.msra.mxu0 0
  %225 = vmatprep.subr.bf16.mxu0 0
  %226 = vmatpush1.bf16.msra.mxu0 0
  %227 = vmatprep.subr.bf16.mxu0 0
  %228 = vmatpush1.bf16.msra.mxu0 0
  %229 = vmatprep.subr.bf16.mxu0 0
  %230 = vmatpush1.bf16.msra.mxu0 0
  %231 = vmatprep.subr.bf16.mxu0 0
  %232 = vmatpush1.bf16.msra.mxu0 0
  %233 = vmatprep.subr.bf16.mxu0 0
  %234 = vmatpush1.bf16.msra.mxu0 0
  %235 = vmatprep.subr.bf16.mxu0 0
  %236 = vmatpush1.bf16.msra.mxu0 0
  %237 = vmatprep.subr.bf16.mxu0 0
  %238 = vmatpush1.bf16.msra.mxu0 0
  %239 = vmatprep.subr.bf16.mxu0 0
  %240 = vmatpush1.bf16.msra.mxu0 0
  %241 = vmatprep.mubr.bf16.mxu0 0
  %242 = vmatmul.mubr.bf16.gmra.mrb[0].mxu0 %v207
  %v243 = vpop.f32.mrb[0].mxu0
  %v244 = vadd.f32 %v191, %v243
  %v245 = vpop.f32.mrb[0].mxu0
  %v246 = vpop.f32.mrb[0].mxu0
  %v247 = vpop.f32.mrb[0].mxu0
  %248 = vdwg.mxu0
  %v249 = vmul.f32 %v244, 0.01
  %v250 = vmax.f32 %v244, %v249
  %v251 = vpack.c.bf16 %v250, %v250
  %v252 = vld [vmem:[%s7] sm:$0xf]
  %v253 = vld [vmem:[%s8] sm:$0x1]
  %v255 = vlaneseq
  %v256 = vshrl.u32 %v255, 7
  %v257 = vsub.s32 0, %v256
  %v258 = vrot.slane %v253, %v257
  %vm260 = vcmask 64512
  %v262 = vsel %vm260, %v251, 0
  %vm264 = vcmask 1043456
  %v266 = vsel %vm264, %v252, 0
  %268 = vmatprep.subr.bf16.mxu0 0
  %269 = vmatpush1.bf16.msra.mxu0 %v266
  %270 = vmatprep.subr.bf16.mxu0 0
  %271 = vmatpush1.bf16.msra.mxu0 0
  %272 = vmatprep.subr.bf16.mxu0 0
  %273 = vmatpush1.bf16.msra.mxu0 0
  %274 = vmatprep.subr.bf16.mxu0 0
  %275 = vmatpush1.bf16.msra.mxu0 0
  %276 = vmatprep.subr.bf16.mxu0 0
  %277 = vmatpush1.bf16.msra.mxu0 0
  %278 = vmatprep.subr.bf16.mxu0 0
  %279 = vmatpush1.bf16.msra.mxu0 0
  %280 = vmatprep.subr.bf16.mxu0 0
  %281 = vmatpush1.bf16.msra.mxu0 0
  %282 = vmatprep.subr.bf16.mxu0 0
  %283 = vmatpush1.bf16.msra.mxu0 0
  %284 = vmatprep.subr.bf16.mxu0 0
  %285 = vmatpush1.bf16.msra.mxu0 0
  %286 = vmatprep.subr.bf16.mxu0 0
  %287 = vmatpush1.bf16.msra.mxu0 0
  %288 = vmatprep.subr.bf16.mxu0 0
  %289 = vmatpush1.bf16.msra.mxu0 0
  %290 = vmatprep.subr.bf16.mxu0 0
  %291 = vmatpush1.bf16.msra.mxu0 0
  %292 = vmatprep.subr.bf16.mxu0 0
  %293 = vmatpush1.bf16.msra.mxu0 0
  %294 = vmatprep.subr.bf16.mxu0 0
  %295 = vmatpush1.bf16.msra.mxu0 0
  %296 = vmatprep.subr.bf16.mxu0 0
  %297 = vmatpush1.bf16.msra.mxu0 0
  %298 = vmatprep.subr.bf16.mxu0 0
  %299 = vmatpush1.bf16.msra.mxu0 0
  %300 = vmatprep.mubr.bf16.mxu0 0
  %301 = vmatmul.mubr.bf16.gmra.mrb[0].mxu0 %v262
  %v302 = vpop.f32.mrb[0].mxu0
  %v303 = vadd.f32 %v258, %v302
  %v304 = vpop.f32.mrb[0].mxu0
  %v305 = vpop.f32.mrb[0].mxu0
  %v306 = vpop.f32.mrb[0].mxu0
  %307 = vdwg.mxu0
  %vm308 = vcmask 31744
  %309 = vst.msk [vmem:[%s9] sm:$0xff] %vm308, %v303
  // Predicated region
  $region38: #{tpu_custom_call.1} parent=0 // pred_check
    _
  $region39: #{tpu_custom_call.1} parent=0 // pred_check_branch
    %311 = sbr.rel (0) target = $region41
  $region40: #{tpu_custom_call.1} parent=0 // pred_region
    _
  $region41: #{tpu_custom_call.1} parent=0 // pred_fallthru
    _
  // Predicated region
  $region42: #{tpu_custom_call.1} parent=0 // pred_check
    _
  $region43: #{tpu_custom_call.1} parent=0 // pred_check_branch
    %313 = sbr.rel (0) target = $region45
  $region44: #{tpu_custom_call.1} parent=0 // pred_region
    _
  $region45: #{tpu_custom_call.1} parent=0 // pred_fallthru
    _

</llo_original>
